<compile_context>
chip_gen: v6e
topology: v6e:2x2x1
jax: 0.10.0
libtpu: 0.0.40
codegen_flags: <defaults>
</compile_context>

<pallas_src>
import functools

import jax
import jax.numpy as jnp
from jax import lax
from jax.experimental import pallas as pl
from jax.experimental.pallas import tpu as pltpu

_INV_LN2 = 1.4426950408889634          # 1 / ln(2):  log2(x) = ln(x) * _INV_LN2
_COL_CHUNK = 512                        # lane-axis reduction chunk (multiple of 128)


def _sinr_tile_kernel(zs_ref, num_ref, bias_ref, x_ref, fsum_ref, fabs_ref, *,
                      n_valid, col_chunk, ragged):
    """One (batch, row-tile) grid step.

    zs_ref:   (1, N)    transmit powers (lane dense, f32)
    num_ref:  (TR, 1)   zs[i] * X[i, i]                 (f32)
    bias_ref: (TR, 1)   var_noise - num[i]              (f32)
    x_ref:    (TR, N)   row slab of X (f32 or bf16), streamed once from HBM
    outputs:  (1, 1)    partial sum(frac), partial sum(|frac|)
    """
    tr, n = x_ref.shape

    # rowsum[i] = sum_j zs[j] * X[i, j], accumulated over <= col_chunk column
    # slices so the (TR, C) product intermediate stays bounded (VPU multiply +
    # XLU lane reduce; no MXU -- the kernel is HBM bound, the MXU buys nothing).
    def add_chunk(start, size, acc):
        x = x_ref[:, pl.ds(start, size)].astype(jnp.float32)     # (TR, size)
        z = zs_ref[:, pl.ds(start, size)]                        # (1, size)
        return acc + jnp.sum(x * z, axis=-1, keepdims=True)      # (TR, 1)

    acc = jnp.zeros((tr, 1), jnp.float32)
    full = n // col_chunk
    if 0 < full <= 8:
        for c in range(full):                     # few chunks: static unroll
            acc = add_chunk(c * col_chunk, col_chunk, acc)
    elif full > 8:                                # many chunks: rolled loop bounds live ranges
        def body(c, a):
            start = pl.multiple_of(c * col_chunk, col_chunk)
            return add_chunk(start, col_chunk, a)
        acc = lax.fori_loop(0, full, body, acc)
    tail = n - full * col_chunk
    if tail:
        acc = add_chunk(full * col_chunk, tail, acc)

    # var_noise + den == bias + rowsum   (diagonal removed algebraically).
    frac = num_ref[...] / (bias_ref[...] + acc)                   # (TR, 1)
    rate = jnp.log(1.0 + frac) * _INV_LN2                         # log2(1+frac), EUP
    # (kept as log(1+x) to match the module's exact formulation)

    if ragged:
        # X is not padded in HBM; the last row tile reads garbage rows -> mask.
        rid = pl.program_id(1) * tr + lax.broadcasted_iota(jnp.int32, (tr, 1), 0)
        rate = jnp.where(rid < n_valid, rate, 0.0)

    fsum_ref[...] = jnp.sum(rate, keepdims=True)                  # (1, 1)
    fabs_ref[...] = jnp.sum(jnp.abs(rate), keepdims=True)         # (1, 1)


def _row_tiling(n_rows, n_cols, batch, itemsize, row_tile=None,
                slab_bytes=8 << 20, min_grid_steps=8):
    """Row tile TR (sublane-packing aligned) and tile count R.

    Targets ~slab_bytes of X per grid step (big slabs amortize the ~0.35us
    per-step overhead; no fixed row cap).  The slab is shrunk for grid
    parallelism (>= ~min_grid_steps steps so both v7x cores stay fed) only if
    the shrunk slab is still >= 1 MiB."""
    align = max(8, 32 // max(1, itemsize))        # 8 for f32, 16 for bf16
    rup = lambda v, m: -(-v // m) * m
    if row_tile is not None:
        tr = max(align, rup(int(row_tile), align))
        return tr, -(-n_rows // tr)

    row_bytes = max(1, itemsize * n_cols)
    rows_pad = rup(n_rows, align)
    cap = (slab_bytes // row_bytes) // align * align
    cap = max(align, min(cap, rows_pad))
    min_r = -(-min_grid_steps // max(1, batch))
    if min_r > 1:
        tr_par = max(align, rup(-(-n_rows // min_r), align))
        if tr_par * row_bytes >= (1 << 20):       # never shrink below ~1 MiB slabs
            cap = min(cap, tr_par)
    r = -(-n_rows // cap)
    tr = rup(-(-n_rows // r), align)
    return tr, r


def custom_loss_batch_ref(zs, X, var_noise, gamma=0.0):
    """Pure-JAX reference mirroring CustomLossBatch.forward."""
    zs = jnp.asarray(zs, jnp.float32)
    X = jnp.asarray(X, jnp.float32)
    all_info = zs[:, None, :] * X
    num = jnp.diagonal(all_info, axis1=1, axis2=2)
    den = jnp.sum(all_info, axis=2) - num
    frac = jnp.log2(1.0 + num / (var_noise + den))
    u = jnp.sum(frac)
    loss = -u + gamma * jnp.sum(jnp.abs(frac))
    return loss, u


def custom_loss_batch(zs, X, var_noise, gamma=0.0, *, row_tile=None,
                      slab_bytes=8 << 20, min_pallas_n=128):
    """zs: (B, N), X: (B, N, N) (f32 or bf16), var_noise/gamma: scalars.
    Returns (loss, u) matching CustomLossBatch.forward."""
    X = jnp.asarray(X)
    if X.dtype != jnp.bfloat16:
        X = X.astype(jnp.float32)        # bf16 streams as-is; upcast in-kernel
    zs = jnp.asarray(zs, jnp.float32)
    B, N, N2 = X.shape
    assert N == N2 and zs.shape == (B, N)

    var = jnp.asarray(var_noise, jnp.float32)
    gam = jnp.asarray(gamma, jnp.float32)

    if N < min_pallas_n:
        # Tiny problems: XLA fusion is near-optimal; Pallas fixed costs dominate.
        return custom_loss_batch_ref(zs, X, var, gam)

    # O(B*N) prep in XLA: diagonal, numerator, per-row bias.
    diag = jnp.diagonal(X, axis1=1, axis2=2).astype(jnp.float32)   # (B, N)
    num = zs * diag                                                # (B, N)
    bias = var - num                                               # (B, N)

    x_bytes = jnp.dtype(X.dtype).itemsize
    tr, r = _row_tiling(N, N, B, x_bytes, row_tile, slab_bytes)
    n_rows = tr * r
    pad = n_rows - N

    # X itself is never padded (that would double its HBM traffic); only the
    # cheap O(B*N) side vectors are, so garbage rows of a ragged last tile see
    # num=0 / bias=1 before the in-kernel mask zeroes them out.
    if pad:
        num = jnp.pad(num, ((0, 0), (0, pad)))
        bias = jnp.pad(bias, ((0, 0), (0, pad)), constant_values=1.0)

    zs_row = zs[:, None, :]                                        # (B, 1, N)
    num_col = num[:, :, None]                                      # (B, n_rows, 1)
    bias_col = bias[:, :, None]                                    # (B, n_rows, 1)

    cost = pl.CostEstimate(
        flops=2 * B * N * N + 5 * B * N,
        transcendentals=B * N,
        bytes_accessed=x_bytes * B * N * N + 4 * (B * N + 2 * B * n_rows + 2 * B * r),
    )

    # VMEM footprint estimate (double-buffered blocks + chunk-product scratch);
    # raise the scoped-VMEM limit only when the default (16 MiB on v5e) is
    # tight, capped at 48 MiB (safe under v7x's 64 MiB physical VMEM).
    lanes = -(-N // 128) * 128
    est_vmem = (2 * tr * lanes * x_bytes             # X slabs, double buffered
                + 2 * 2 * (tr // 8) * 8 * 128 * 4    # num/bias (TR,1) sublane-tiled
                + 2 * 8 * lanes * 4                  # zs row
                + 2 * tr * min(N, _COL_CHUNK) * 4)   # chunk-product headroom
    cp = dict(dimension_semantics=("parallel", "parallel"))
    if est_vmem > (12 << 20):
        cp["vmem_limit_bytes"] = int(min(48 << 20, max(24 << 20, est_vmem * 3 // 2)))

    kernel = functools.partial(_sinr_tile_kernel, n_valid=N,
                               col_chunk=_COL_CHUNK, ragged=bool(pad))

    fsum, fabs = pl.pallas_call(
        kernel,
        out_shape=(
            jax.ShapeDtypeStruct((B, r, 1, 1), jnp.float32),
            jax.ShapeDtypeStruct((B, r, 1, 1), jnp.float32),
        ),
        grid_spec=pltpu.PrefetchScalarGridSpec(
            num_scalar_prefetch=0,
            grid=(B, r),
            in_specs=[
                pl.BlockSpec((None, 1, N), lambda b, t: (b, 0, 0)),    # zs row
                pl.BlockSpec((None, tr, 1), lambda b, t: (b, t, 0)),   # numerator
                pl.BlockSpec((None, tr, 1), lambda b, t: (b, t, 0)),   # bias
                pl.BlockSpec((None, tr, N), lambda b, t: (b, t, 0)),   # X row slab
            ],
            out_specs=(
                pl.BlockSpec((None, None, 1, 1), lambda b, t: (b, t, 0, 0)),
                pl.BlockSpec((None, None, 1, 1), lambda b, t: (b, t, 0, 0)),
            ),
        ),
        compiler_params=pltpu.CompilerParams(**cp),
        cost_estimate=cost,
    )(zs_row, num_col, bias_col, X)

    u = jnp.sum(fsum)
    l1 = jnp.sum(fabs)
    return -u + gam * l1, u


if __name__ == "__main__":
    key = jax.random.PRNGKey(0)
    k1, k2, k3, k4, k5, k6, k7, k8 = jax.random.split(key, 8)

    # 1) Tiny batched problem (forced onto the Pallas path).
    B, N = 2, 16
    zs = jax.random.uniform(k1, (B, N), dtype=jnp.float32)          # power allocations
    X = jax.random.uniform(k2, (B, N, N), dtype=jnp.float32) + 0.1  # channel gains
    loss, u = custom_loss_batch(zs, X, 0.5, 0.1, min_pallas_n=0)
    jax.block_until_ready((loss, u))
    loss_ref, u_ref = custom_loss_batch_ref(zs, X, 0.5, 0.1)
    assert jnp.allclose(loss, loss_ref, rtol=1e-4, atol=1e-4), (loss, loss_ref)
    assert jnp.allclose(u, u_ref, rtol=1e-4, atol=1e-4), (u, u_ref)

    # 1b) Same shapes through the small-N XLA fallback (default threshold).
    loss_f, u_f = custom_loss_batch(zs, X, 0.5, 0.1)
    jax.block_until_ready((loss_f, u_f))
    assert jnp.allclose(loss_f, loss_ref, rtol=1e-4, atol=1e-4), (loss_f, loss_ref)
    assert jnp.allclose(u_f, u_ref, rtol=1e-4, atol=1e-4), (u_f, u_ref)

    # 2) Ragged last row tile + in-kernel row masking (N not tile aligned).
    B2, N2 = 3, 20
    zs2 = jax.random.uniform(k3, (B2, N2), dtype=jnp.float32)
    X2 = jax.random.uniform(k4, (B2, N2, N2), dtype=jnp.float32) + 0.1
    loss2, u2 = custom_loss_batch(zs2, X2, 0.25, 0.05, row_tile=8, min_pallas_n=0)
    jax.block_until_ready((loss2, u2))
    loss2_ref, u2_ref = custom_loss_batch_ref(zs2, X2, 0.25, 0.05)
    assert jnp.allclose(loss2, loss2_ref, rtol=1e-4, atol=1e-4), (loss2, loss2_ref)
    assert jnp.allclose(u2, u2_ref, rtol=1e-4, atol=1e-4), (u2, u2_ref)

    # 3) Default tiling + chunked column reduction (N > 512: chunk + tail).
    B3, N3 = 1, 640
    zs3 = jax.random.uniform(k5, (B3, N3), dtype=jnp.float32)
    X3 = jax.random.uniform(k6, (B3, N3, N3), dtype=jnp.float32) + 0.1
    loss3, u3 = custom_loss_batch(zs3, X3, 1.0, 0.2)
    jax.block_until_ready((loss3, u3))
    loss3_ref, u3_ref = custom_loss_batch_ref(zs3, X3, 1.0, 0.2)
    assert jnp.allclose(loss3, loss3_ref, rtol=1e-4, atol=1e-4), (loss3, loss3_ref)
    assert jnp.allclose(u3, u3_ref, rtol=1e-4, atol=1e-4), (u3, u3_ref)

    # 4) bf16 X streamed directly (half the HBM bytes), upcast in-kernel.
    B4, N4 = 2, 64
    zs4 = jax.random.uniform(k7, (B4, N4), dtype=jnp.float32)
    X4 = (jax.random.uniform(k8, (B4, N4, N4), dtype=jnp.float32) + 0.1
          ).astype(jnp.bfloat16)
    loss4, u4 = custom_loss_batch(zs4, X4, 0.5, 0.1, min_pallas_n=0, row_tile=32)
    jax.block_until_ready((loss4, u4))
    loss4_ref, u4_ref = custom_loss_batch_ref(zs4, X4.astype(jnp.float32), 0.5, 0.1)
    assert jnp.allclose(loss4, loss4_ref, rtol=2e-4, atol=2e-4), (loss4, loss4_ref)
    assert jnp.allclose(u4, u4_ref, rtol=2e-4, atol=2e-4), (u4, u4_ref)

    print("KERNEL_OK")
</pallas_src>

<mosaic_0001>
module attributes {stable_mosaic.version = 11 : i64} {
  func.func @_sinr_tile_kernel(%arg0: i32, %arg1: i32, %arg2: memref<1x1x16xf32, #tpu.memory_space<vmem>>, %arg3: memref<1x16x1xf32, #tpu.memory_space<vmem>>, %arg4: memref<1x16x1xf32, #tpu.memory_space<vmem>>, %arg5: memref<1x16x16xf32, #tpu.memory_space<vmem>>, %arg6: memref<1x1x1x1xf32, #tpu.memory_space<vmem>>, %arg7: memref<1x1x1x1xf32, #tpu.memory_space<vmem>>) attributes {dimension_semantics = [#tpu.dimension_semantics<parallel>, #tpu.dimension_semantics<parallel>], iteration_bounds = array<i64: 2, 1>, scalar_prefetch = 0 : i64, scratch_operands = 0 : i64, tpu.core_type = #tpu.core_type<tc>, window_params = [{transform_indices = @transform_0, window_bounds = array<i64: 1, 1, 16>}, {transform_indices = @transform_1, window_bounds = array<i64: 1, 16, 1>}, {transform_indices = @transform_2, window_bounds = array<i64: 1, 16, 1>}, {transform_indices = @transform_3, window_bounds = array<i64: 1, 16, 16>}, {transform_indices = @transform_4, window_bounds = array<i64: 1, 1, 1, 1>}, {transform_indices = @transform_5, window_bounds = array<i64: 1, 1, 1, 1>}]} {
    %cst = arith.constant 0.000000e+00 : f32
    %0 = vector.broadcast %cst : f32 to vector<16x1xf32>
    %c0 = arith.constant 0 : index
    %c0_0 = arith.constant 0 : index
    %c0_1 = arith.constant 0 : index
    %1 = vector.load %arg5[%c0, %c0_0, %c0_1] : memref<1x16x16xf32, #tpu.memory_space<vmem>>, vector<1x16x16xf32>
    %2 = vector.shape_cast %1 : vector<1x16x16xf32> to vector<16x16xf32>
    %c0_2 = arith.constant 0 : index
    %c0_3 = arith.constant 0 : index
    %c0_4 = arith.constant 0 : index
    %3 = vector.load %arg2[%c0_2, %c0_3, %c0_4] : memref<1x1x16xf32, #tpu.memory_space<vmem>>, vector<1x1x16xf32>
    %4 = vector.shape_cast %3 : vector<1x1x16xf32> to vector<1x16xf32>
    %5 = vector.broadcast %4 : vector<1x16xf32> to vector<16x16xf32>
    %6 = arith.mulf %2, %5 : vector<16x16xf32>
    %cst_5 = arith.constant dense<0.000000e+00> : vector<16xf32>
    %7 = vector.multi_reduction <add>, %6, %cst_5 [1] : vector<16x16xf32> to vector<16xf32>
    %8 = vector.shape_cast %7 : vector<16xf32> to vector<16x1xf32>
    %9 = arith.addf %0, %8 : vector<16x1xf32>
    %c0_6 = arith.constant 0 : index
    %c0_7 = arith.constant 0 : index
    %c0_8 = arith.constant 0 : index
    %10 = vector.load %arg3[%c0_6, %c0_7, %c0_8] : memref<1x16x1xf32, #tpu.memory_space<vmem>>, vector<1x16x1xf32>
    %11 = vector.shape_cast %10 : vector<1x16x1xf32> to vector<16x1xf32>
    %c0_9 = arith.constant 0 : index
    %c0_10 = arith.constant 0 : index
    %c0_11 = arith.constant 0 : index
    %12 = vector.load %arg4[%c0_9, %c0_10, %c0_11] : memref<1x16x1xf32, #tpu.memory_space<vmem>>, vector<1x16x1xf32>
    %13 = vector.shape_cast %12 : vector<1x16x1xf32> to vector<16x1xf32>
    %14 = arith.addf %13, %9 : vector<16x1xf32>
    %15 = arith.divf %11, %14 : vector<16x1xf32>
    %cst_12 = arith.constant 1.000000e+00 : f32
    %16 = vector.broadcast %cst_12 : f32 to vector<16x1xf32>
    %17 = arith.addf %16, %15 : vector<16x1xf32>
    %18 = math.log %17 : vector<16x1xf32>
    %cst_13 = arith.constant 1.44269502 : f32
    %19 = vector.broadcast %cst_13 : f32 to vector<16x1xf32>
    %20 = arith.mulf %18, %19 : vector<16x1xf32>
    %21 = vector.shape_cast %20 : vector<16x1xf32> to vector<1x16x1xf32>
    %cst_14 = arith.constant dense<0.000000e+00> : vector<1xf32>
    %22 = vector.multi_reduction <add>, %21, %cst_14 [1, 2] : vector<1x16x1xf32> to vector<1xf32>
    %23 = vector.shape_cast %22 : vector<1xf32> to vector<1x1x1xf32>
    %24 = vector.extract %23[0, 0, 0] : f32 from vector<1x1x1xf32>
    %25 = vector.broadcast %24 : f32 to vector<1x1xf32>
    %c0_15 = arith.constant 0 : index
    %c0_16 = arith.constant 0 : index
    %c0_17 = arith.constant 0 : index
    %c0_18 = arith.constant 0 : index
    %26 = vector.load %arg6[%c0_15, %c0_16, %c0_17, %c0_18] : memref<1x1x1x1xf32, #tpu.memory_space<vmem>>, vector<1x1x1x1xf32>
    %27 = vector.shape_cast %26 : vector<1x1x1x1xf32> to vector<1x1xf32>
    %28 = vector.shape_cast %25 : vector<1x1xf32> to vector<1x1x1x1xf32>
    tpu.vector_store %arg6[%c0_15, %c0_16, %c0_17, %c0_18], %28 {strides = array<i32>} : memref<1x1x1x1xf32, #tpu.memory_space<vmem>>, vector<1x1x1x1xf32>,
    %29 = math.absf %20 : vector<16x1xf32>
    %30 = vector.shape_cast %29 : vector<16x1xf32> to vector<1x16x1xf32>
    %cst_19 = arith.constant dense<0.000000e+00> : vector<1xf32>
    %31 = vector.multi_reduction <add>, %30, %cst_19 [1, 2] : vector<1x16x1xf32> to vector<1xf32>
    %32 = vector.shape_cast %31 : vector<1xf32> to vector<1x1x1xf32>
    %33 = vector.extract %32[0, 0, 0] : f32 from vector<1x1x1xf32>
    %34 = vector.broadcast %33 : f32 to vector<1x1xf32>
    %c0_20 = arith.constant 0 : index
    %c0_21 = arith.constant 0 : index
    %c0_22 = arith.constant 0 : index
    %c0_23 = arith.constant 0 : index
    %35 = vector.load %arg7[%c0_20, %c0_21, %c0_22, %c0_23] : memref<1x1x1x1xf32, #tpu.memory_space<vmem>>, vector<1x1x1x1xf32>
    %36 = vector.shape_cast %35 : vector<1x1x1x1xf32> to vector<1x1xf32>
    %37 = vector.shape_cast %34 : vector<1x1xf32> to vector<1x1x1x1xf32>
    tpu.vector_store %arg7[%c0_20, %c0_21, %c0_22, %c0_23], %37 {strides = array<i32>} : memref<1x1x1x1xf32, #tpu.memory_space<vmem>>, vector<1x1x1x1xf32>,
    return
  }
  func.func @transform_0(%arg0: i32, %arg1: i32) -> (i32, i32, i32) {
    %c0_i32 = arith.constant 0 : i32
    %c0_i32_0 = arith.constant 0 : i32
    %c0_i32_1 = arith.constant 0 : i32
    return %arg0, %c0_i32, %c0_i32_0 : i32, i32, i32
  }
  func.func @transform_1(%arg0: i32, %arg1: i32) -> (i32, i32, i32) {
    %c0_i32 = arith.constant 0 : i32
    %c0_i32_0 = arith.constant 0 : i32
    return %arg0, %arg1, %c0_i32 : i32, i32, i32
  }
  func.func @transform_2(%arg0: i32, %arg1: i32) -> (i32, i32, i32) {
    %c0_i32 = arith.constant 0 : i32
    %c0_i32_0 = arith.constant 0 : i32
    return %arg0, %arg1, %c0_i32 : i32, i32, i32
  }
  func.func @transform_3(%arg0: i32, %arg1: i32) -> (i32, i32, i32) {
    %c0_i32 = arith.constant 0 : i32
    %c0_i32_0 = arith.constant 0 : i32
    return %arg0, %arg1, %c0_i32 : i32, i32, i32
  }
  func.func @transform_4(%arg0: i32, %arg1: i32) -> (i32, i32, i32, i32) {
    %c0_i32 = arith.constant 0 : i32
    %c0_i32_0 = arith.constant 0 : i32
    %c0_i32_1 = arith.constant 0 : i32
    return %arg0, %arg1, %c0_i32, %c0_i32_0 : i32, i32, i32, i32
  }
  func.func @transform_5(%arg0: i32, %arg1: i32) -> (i32, i32, i32, i32) {
    %c0_i32 = arith.constant 0 : i32
    %c0_i32_0 = arith.constant 0 : i32
    %c0_i32_1 = arith.constant 0 : i32
    return %arg0, %arg1, %c0_i32, %c0_i32_0 : i32, i32, i32, i32
  }
}

</mosaic_0001>

<llo_original>
// kernel: tpu_custom_call.1
$region0: #{tpu_custom_call.1}
  #allocation0 [shape = 'u32[]', space=smem, size = 0x4, offset = 0x4, fixed_abs, tag = 'smem constant byte address 0x4 - core index']
  #allocation1 [shape = 'u32[144,128]{1,0:T(1,128)}', space=vmem, size = 0x12000, scoped, tag = 'internal scratch']
  %s0 = inlined_call_operand.vmem [shape: f32[2,1,16], index: 0, kind: input, shape index: {}]
  %s1 = inlined_call_operand.vmem [shape: f32[2,16,1], index: 1, kind: input, shape index: {}]
  %s2 = inlined_call_operand.vmem [shape: f32[2,16,1], index: 2, kind: input, shape index: {}]
  %s3 = inlined_call_operand.vmem [shape: f32[2,16,16], index: 3, kind: input, shape index: {}]
  %s4 = inlined_call_operand.vmem [shape: f32[2,1,1,1], index: 4, kind: output, shape index: {0}]
  %s5 = inlined_call_operand.vmem [shape: f32[2,1,1,1], index: 5, kind: output, shape index: {1}]
  %6 = xla_tuple %s4, %s5
  %s7 = sld [smem:[#allocation0]]
  $region57: #{tpu_custom_call.1} parent=0
    _
  %s9 = ssub.s32 1, %s7
  %s10 = scalar_select 0, %s9, %s7
  loop: start=0, step=1, limit=4
  $region2: #{tpu_custom_call.1} parent=0 // loop_pre_header
    _
  $region3: #{tpu_custom_call.1} parent=0 // loop_header
    %s12 = sphi 0, %s16
    %p13 = scmp.ge.s32.totalorder %s12, 4
    %s19 = sphi 0, %s31
    %s20 = sphi 0, %s27
    %s21 = sphi 0, %s19
    %s22 = sphi 0, %s20
    %s23 = sphi 0, %s21
    %s24 = sphi 0, %s22
    %s34 = sphi 0, %s36
    %s37 = sphi 0, %s34
    %s38 = sphi 0, %s37
    %s54 = sphi 0, %s38
    %s62 = sphi 0, %s64
    %s65 = sphi 0, %s62
    %s66 = sphi 0, %s65
    %s82 = sphi 0, %s66
    %s90 = sphi 0, %s92
    %s93 = sphi 0, %s90
    %s94 = sphi 0, %s93
    %s110 = sphi 0, %s94
    %s118 = sphi 0, %s120
    %s121 = sphi 0, %s118
    %s122 = sphi 0, %s121
    %s138 = sphi 0, %s122
    %s146 = sphi 0, %s148
    %s149 = sphi 0, %s146
    %s150 = sphi 0, %s149
    %s166 = sphi 0, %s150
    %s174 = sphi 0, %s176
    %s177 = sphi 0, %s174
    %s178 = sphi 0, %s177
    %s194 = sphi 0, %s178
  $region4: #{tpu_custom_call.1} parent=0 // loop_header_branch
    %15 = sbr.rel (%p13) target = $region8
  $region5: #{tpu_custom_call.1} parent=0 // loop_body
    %s17 = ssub.s32 %s12, 1
    %s18 = ssub.s32 %s12, 2
    %s25 = sadd.s32 1, %s20
    %p26 = scmp.ge.s32.totalorder %s25, 1
    %s27 = scalar_select %p26, 0, %s25
    %s28 = sadd.s32 1, %s19
    %s29 = scalar_select %p26, %s28, %s19
    %p30 = scmp.ge.s32.totalorder %s29, 2
    %s31 = scalar_select %p30, 0, %s29
    %s32 = ssub.s32 %s19, %s31
    %p33 = scmp.eq.s32.totalorder %s32, 0
    %s35 = sadd.s32 %s34, 1
    %s36 = scalar_select %p33, %s34, %s35
    %p39 = pneg %p33
    %p40 = scmp.eq.s32.totalorder %s12, 1
    %p41 = por %p39, %p40
    %p42 = scmp.ne.s32.totalorder %s34, %s37
    %p43 = scmp.eq.s32.totalorder %s12, 0
    %p44 = por %p42, %p43
    %p45 = scmp.ne.s32.totalorder %s34, %s37
    %p46 = scmp.eq.s32.totalorder %s17, 1
    %p47 = por %p45, %p46
    %p48 = scmp.ne.s32.totalorder %s37, %s38
    %p49 = scmp.eq.s32.totalorder %s17, 0
    %p50 = por %p48, %p49
    %p51 = scmp.ne.s32.totalorder %s37, %s38
    %p52 = scmp.eq.s32.totalorder %s18, 1
    %p53 = por %p51, %p52
    %p55 = scmp.ne.s32.totalorder %s38, %s54
    %p56 = scmp.eq.s32.totalorder %s18, 0
    %p57 = por %p55, %p56
    %s58 = ssub.s32 %s19, %s31
    %s59 = ssub.s32 %s20, %s27
    %s60 = sor.u32 %s58, %s59
    %p61 = scmp.eq.s32.totalorder %s60, 0
    %s63 = sadd.s32 %s62, 1
    %s64 = scalar_select %p61, %s62, %s63
    %p67 = pneg %p61
    %p68 = scmp.eq.s32.totalorder %s12, 1
    %p69 = por %p67, %p68
    %p70 = scmp.ne.s32.totalorder %s62, %s65
    %p71 = scmp.eq.s32.totalorder %s12, 0
    %p72 = por %p70, %p71
    %p73 = scmp.ne.s32.totalorder %s62, %s65
    %p74 = scmp.eq.s32.totalorder %s17, 1
    %p75 = por %p73, %p74
    %p76 = scmp.ne.s32.totalorder %s65, %s66
    %p77 = scmp.eq.s32.totalorder %s17, 0
    %p78 = por %p76, %p77
    %p79 = scmp.ne.s32.totalorder %s65, %s66
    %p80 = scmp.eq.s32.totalorder %s18, 1
    %p81 = por %p79, %p80
    %p83 = scmp.ne.s32.totalorder %s66, %s82
    %p84 = scmp.eq.s32.totalorder %s18, 0
    %p85 = por %p83, %p84
    %s86 = ssub.s32 %s19, %s31
    %s87 = ssub.s32 %s20, %s27
    %s88 = sor.u32 %s86, %s87
    %p89 = scmp.eq.s32.totalorder %s88, 0
    %s91 = sadd.s32 %s90, 1
    %s92 = scalar_select %p89, %s90, %s91
    %p95 = pneg %p89
    %p96 = scmp.eq.s32.totalorder %s12, 1
    %p97 = por %p95, %p96
    %p98 = scmp.ne.s32.totalorder %s90, %s93
    %p99 = scmp.eq.s32.totalorder %s12, 0
    %p100 = por %p98, %p99
    %p101 = scmp.ne.s32.totalorder %s90, %s93
    %p102 = scmp.eq.s32.totalorder %s17, 1
    %p103 = por %p101, %p102
    %p104 = scmp.ne.s32.totalorder %s93, %s94
    %p105 = scmp.eq.s32.totalorder %s17, 0
    %p106 = por %p104, %p105
    %p107 = scmp.ne.s32.totalorder %s93, %s94
    %p108 = scmp.eq.s32.totalorder %s18, 1
    %p109 = por %p107, %p108
    %p111 = scmp.ne.s32.totalorder %s94, %s110
    %p112 = scmp.eq.s32.totalorder %s18, 0
    %p113 = por %p111, %p112
    %s114 = ssub.s32 %s19, %s31
    %s115 = ssub.s32 %s20, %s27
    %s116 = sor.u32 %s114, %s115
    %p117 = scmp.eq.s32.totalorder %s116, 0
    %s119 = sadd.s32 %s118, 1
    %s120 = scalar_select %p117, %s118, %s119
    %p123 = pneg %p117
    %p124 = scmp.eq.s32.totalorder %s12, 1
    %p125 = por %p123, %p124
    %p126 = scmp.ne.s32.totalorder %s118, %s121
    %p127 = scmp.eq.s32.totalorder %s12, 0
    %p128 = por %p126, %p127
    %p129 = scmp.ne.s32.totalorder %s118, %s121
    %p130 = scmp.eq.s32.totalorder %s17, 1
    %p131 = por %p129, %p130
    %p132 = scmp.ne.s32.totalorder %s121, %s122
    %p133 = scmp.eq.s32.totalorder %s17, 0
    %p134 = por %p132, %p133
    %p135 = scmp.ne.s32.totalorder %s121, %s122
    %p136 = scmp.eq.s32.totalorder %s18, 1
    %p137 = por %p135, %p136
    %p139 = scmp.ne.s32.totalorder %s122, %s138
    %p140 = scmp.eq.s32.totalorder %s18, 0
    %p141 = por %p139, %p140
    %s142 = ssub.s32 %s19, %s31
    %s143 = ssub.s32 %s20, %s27
    %s144 = sor.u32 %s142, %s143
    %p145 = scmp.eq.s32.totalorder %s144, 0
    %s147 = sadd.s32 %s146, 1
    %s148 = scalar_select %p145, %s146, %s147
    %p151 = pneg %p145
    %p152 = scmp.eq.s32.totalorder %s12, 1
    %p153 = por %p151, %p152
    %p154 = scmp.ne.s32.totalorder %s146, %s149
    %p155 = scmp.eq.s32.totalorder %s12, 0
    %p156 = por %p154, %p155
    %p157 = scmp.ne.s32.totalorder %s146, %s149
    %p158 = scmp.eq.s32.totalorder %s17, 1
    %p159 = por %p157, %p158
    %p160 = scmp.ne.s32.totalorder %s149, %s150
    %p161 = scmp.eq.s32.totalorder %s17, 0
    %p162 = por %p160, %p161
    %p163 = scmp.ne.s32.totalorder %s149, %s150
    %p164 = scmp.eq.s32.totalorder %s18, 1
    %p165 = por %p163, %p164
    %p167 = scmp.ne.s32.totalorder %s150, %s166
    %p168 = scmp.eq.s32.totalorder %s18, 0
    %p169 = por %p167, %p168
    %s170 = ssub.s32 %s19, %s31
    %s171 = ssub.s32 %s20, %s27
    %s172 = sor.u32 %s170, %s171
    %p173 = scmp.eq.s32.totalorder %s172, 0
    %s175 = sadd.s32 %s174, 1
    %s176 = scalar_select %p173, %s174, %s175
    %p179 = pneg %p173
    %p180 = scmp.eq.s32.totalorder %s12, 1
    %p181 = por %p179, %p180
    %p182 = scmp.ne.s32.totalorder %s174, %s177
    %p183 = scmp.eq.s32.totalorder %s12, 0
    %p184 = por %p182, %p183
    %p185 = scmp.ne.s32.totalorder %s174, %s177
    %p186 = scmp.eq.s32.totalorder %s17, 1
    %p187 = por %p185, %p186
    %p188 = scmp.ne.s32.totalorder %s177, %s178
    %p189 = scmp.eq.s32.totalorder %s17, 0
    %p190 = por %p188, %p189
    %p191 = scmp.ne.s32.totalorder %s177, %s178
    %p192 = scmp.eq.s32.totalorder %s18, 1
    %p193 = por %p191, %p192
    %p195 = scmp.ne.s32.totalorder %s178, %s194
    %p196 = scmp.eq.s32.totalorder %s18, 0
    %p197 = por %p195, %p196
    %p198 = scmp.le.s32.totalorder 1, %s12
    %p199 = scmp.lt.s32.totalorder %s12, 3
    %p200 = pnand %p198, %p199
    %p201 = pneg %p200
    // Predicated region
    $region9: #{tpu_custom_call.1} parent=5 // pred_check
      _
    $region10: #{tpu_custom_call.1} parent=5 // pred_check_branch
      %203 = sbr.rel (%p200) target = $region12
    $region11: #{tpu_custom_call.1} parent=5 // pred_region
      %s204 = ssub.s32 %s12, 1
    $region12: #{tpu_custom_call.1} parent=5 // pred_fallthru
      _
    %p205 = scmp.lt.s32.totalorder %s12, 2
    // Predicated region
    $region13: #{tpu_custom_call.1} parent=5 // pred_check
      %p206 = pneg %p205
    $region14: #{tpu_custom_call.1} parent=5 // pred_check_branch
      %208 = sbr.rel (%p206) target = $region16
    $region15: #{tpu_custom_call.1} parent=5 // pred_region
      // Predicated region
      $region17: #{tpu_custom_call.1} parent=15 // pred_check
        %p209 = pneg %p44
      $region18: #{tpu_custom_call.1} parent=15 // pred_check_branch
        %211 = sbr.rel (%p209) target = $region20
      $region19: #{tpu_custom_call.1} parent=15 // pred_region
        %p212 = scmp.lt.s32.totalorder %s19, 1
        %s213 = scalar_select %p212, %s19, 1
        %s214 = scalar_lea.vmem %s0, %s213
      $region20: #{tpu_custom_call.1} parent=15 // pred_fallthru
        _
      // Predicated region
      $region21: #{tpu_custom_call.1} parent=15 // pred_check
        %p215 = pneg %p72
      $region22: #{tpu_custom_call.1} parent=15 // pred_check_branch
        %217 = sbr.rel (%p215) target = $region24
      $region23: #{tpu_custom_call.1} parent=15 // pred_region
        %s218 = smul.u32 2, %s20
        %p219 = scmp.lt.s32.totalorder %s19, 1
        %s220 = scalar_select %p219, %s19, 1
        %p221 = scmp.lt.s32.totalorder %s218, 1
        %s222 = scalar_select %p221, %s218, 1
        %s223 = smul.addr %s220, 2
        %s224 = sadd.s32 %s222, %s223
        %s225 = smul.addr %s224, 8
        %s226 = scalar_lea.vmem %s1, %s225
        %s227 = smul.u32 2, %s20
      $region24: #{tpu_custom_call.1} parent=15 // pred_fallthru
        _
      // Predicated region
      $region25: #{tpu_custom_call.1} parent=15 // pred_check
        %p228 = pneg %p100
      $region26: #{tpu_custom_call.1} parent=15 // pred_check_branch
        %230 = sbr.rel (%p228) target = $region28
      $region27: #{tpu_custom_call.1} parent=15 // pred_region
        %s231 = smul.u32 2, %s20
        %p232 = scmp.lt.s32.totalorder %s19, 1
        %s233 = scalar_select %p232, %s19, 1
        %p234 = scmp.lt.s32.totalorder %s231, 1
        %s235 = scalar_select %p234, %s231, 1
        %s236 = smul.addr %s233, 2
        %s237 = sadd.s32 %s235, %s236
        %s238 = smul.addr %s237, 8
        %s239 = scalar_lea.vmem %s2, %s238
        %s240 = smul.u32 2, %s20
      $region28: #{tpu_custom_call.1} parent=15 // pred_fallthru
        _
      // Predicated region
      $region29: #{tpu_custom_call.1} parent=15 // pred_check
        %p241 = pneg %p128
      $region30: #{tpu_custom_call.1} parent=15 // pred_check_branch
        %243 = sbr.rel (%p241) target = $region32
      $region31: #{tpu_custom_call.1} parent=15 // pred_region
        %s244 = smul.u32 2, %s20
        %p245 = scmp.lt.s32.totalorder %s19, 1
        %s246 = scalar_select %p245, %s19, 1
        %p247 = scmp.lt.s32.totalorder %s244, 1
        %s248 = scalar_select %p247, %s244, 1
        %s249 = smul.addr %s246, 2
        %s250 = sadd.s32 %s248, %s249
        %s251 = smul.addr %s250, 8
        %s252 = scalar_lea.vmem %s3, %s251
        %s253 = smul.u32 2, %s20
      $region32: #{tpu_custom_call.1} parent=15 // pred_fallthru
        _
    $region16: #{tpu_custom_call.1} parent=5 // pred_fallthru
      _
    %p254 = scmp.le.s32.totalorder 1, %s12
    %p255 = scmp.lt.s32.totalorder %s12, 3
    %p256 = pnand %p254, %p255
    %p257 = pneg %p256
    // Predicated region
    $region33: #{tpu_custom_call.1} parent=5 // pred_check
      _
    $region34: #{tpu_custom_call.1} parent=5 // pred_check_branch
      %259 = sbr.rel (%p256) target = $region36
    $region35: #{tpu_custom_call.1} parent=5 // pred_region
      %s260 = ssub.s32 %s12, 1
      %p261 = scmp.lt.s32.totalorder %s21, 1
      %s262 = scalar_select %p261, %s21, 1
      %s263 = scalar_lea.vmem %s0, %s262
      %p264 = pneg %p50
      %p265 = pneg %p47
      %s266 = smul.u32 2, %s22
      %p267 = scmp.lt.s32.totalorder %s21, 1
      %s268 = scalar_select %p267, %s21, 1
      %p269 = scmp.lt.s32.totalorder %s266, 1
      %s270 = scalar_select %p269, %s266, 1
      %s271 = smul.addr %s268, 2
      %s272 = sadd.s32 %s270, %s271
      %s273 = smul.addr %s272, 8
      %s274 = scalar_lea.vmem %s1, %s273
      %p275 = pneg %p78
      %p276 = pneg %p75
      %s277 = smul.u32 2, %s22
      %p278 = scmp.lt.s32.totalorder %s21, 1
      %s279 = scalar_select %p278, %s21, 1
      %p280 = scmp.lt.s32.totalorder %s277, 1
      %s281 = scalar_select %p280, %s277, 1
      %s282 = smul.addr %s279, 2
      %s283 = sadd.s32 %s281, %s282
      %s284 = smul.addr %s283, 8
      %s285 = scalar_lea.vmem %s2, %s284
      %p286 = pneg %p106
      %p287 = pneg %p103
      %s288 = smul.u32 2, %s22
      %p289 = scmp.lt.s32.totalorder %s21, 1
      %s290 = scalar_select %p289, %s21, 1
      %p291 = scmp.lt.s32.totalorder %s288, 1
      %s292 = scalar_select %p291, %s288, 1
      %s293 = smul.addr %s290, 2
      %s294 = sadd.s32 %s292, %s293
      %s295 = smul.addr %s294, 8
      %s296 = scalar_lea.vmem %s3, %s295
      %p297 = pneg %p134
      %p298 = pneg %p131
      %p299 = pneg %p162
      %p300 = pneg %p159
      %p301 = scmp.lt.s32.totalorder %s21, 1
      %s302 = scalar_select %p301, %s21, 1
      %p303 = scmp.lt.s32.totalorder %s22, 0
      %s304 = scalar_select %p303, %s22, 0
      %s305 = sadd.s32 %s304, %s302
      %s306 = scalar_lea.vmem %s4, %s305
      %p307 = pneg %p190
      %p308 = pneg %p187
      %p309 = scmp.lt.s32.totalorder %s21, 1
      %s310 = scalar_select %p309, %s21, 1
      %p311 = scmp.lt.s32.totalorder %s22, 0
      %s312 = scalar_select %p311, %s22, 0
      %s313 = sadd.s32 %s312, %s310
      %s314 = scalar_lea.vmem %s5, %s313
      %p315 = scmp.lt.s32.totalorder %s21, 1
      %s316 = scalar_select %p315, %s21, 1
      %s317 = scalar_lea.vmem %s0, %s316
      %s318 = smul.u32 2, %s22
      %p319 = scmp.lt.s32.totalorder %s21, 1
      %s320 = scalar_select %p319, %s21, 1
      %p321 = scmp.lt.s32.totalorder %s318, 1
      %s322 = scalar_select %p321, %s318, 1
      %s323 = smul.addr %s320, 2
      %s324 = sadd.s32 %s322, %s323
      %s325 = smul.addr %s324, 8
      %s326 = scalar_lea.vmem %s1, %s325
      %s327 = smul.u32 2, %s22
      %s328 = smul.u32 2, %s22
      %p329 = scmp.lt.s32.totalorder %s21, 1
      %s330 = scalar_select %p329, %s21, 1
      %p331 = scmp.lt.s32.totalorder %s328, 1
      %s332 = scalar_select %p331, %s328, 1
      %s333 = smul.addr %s330, 2
      %s334 = sadd.s32 %s332, %s333
      %s335 = smul.addr %s334, 8
      %s336 = scalar_lea.vmem %s2, %s335
      %s337 = smul.u32 2, %s22
      %s338 = smul.u32 2, %s22
      %p339 = scmp.lt.s32.totalorder %s21, 1
      %s340 = scalar_select %p339, %s21, 1
      %p341 = scmp.lt.s32.totalorder %s338, 1
      %s342 = scalar_select %p341, %s338, 1
      %s343 = smul.addr %s340, 2
      %s344 = sadd.s32 %s342, %s343
      %s345 = smul.addr %s344, 8
      %s346 = scalar_lea.vmem %s3, %s345
      %s347 = smul.u32 2, %s22
      %p348 = scmp.lt.s32.totalorder %s21, 1
      %s349 = scalar_select %p348, %s21, 1
      %p350 = scmp.lt.s32.totalorder %s22, 0
      %s351 = scalar_select %p350, %s22, 0
      %s352 = sadd.s32 %s351, %s349
      %s353 = scalar_lea.vmem %s4, %s352
      %p354 = scmp.lt.s32.totalorder %s21, 1
      %s355 = scalar_select %p354, %s21, 1
      %p356 = scmp.lt.s32.totalorder %s22, 0
      %s357 = scalar_select %p356, %s22, 0
      %s358 = sadd.s32 %s357, %s355
      %s359 = scalar_lea.vmem %s5, %s358
      %v360 = vld [vmem:[%s346] sm:$0xff]
      %v361 = vld [vmem:[%s346 + $0x8] sm:$0xff]
      %v362 = vld [vmem:[%s317] sm:$0x1]
      %v364 = vlaneseq
      %v365 = vshrl.u32 %v364, 7
      %v366 = vsub.s32 0, %v365
      %v367 = vrot.slane %v362, %v366
      %v369 = vmul.f32 %v360, %v367
      %v370 = vmul.f32 %v361, %v367
      %vm371 = vcmask 130048
      %v372 = vsel %vm371, %v369, 0.0
      %373 = vadd.xlane.f32.xlu0 %v372
      %v374 = vpop.xlane.xlu0 %373
      %v375 = vsel %vm371, %v370, 0.0
      %376 = vadd.xlane.f32.xlu0 %v375
      %v377 = vpop.xlane.xlu0 %376
      %v378 = vadd.f32 %v374, 0.0
      %v379 = vadd.f32 %v377, 0.0
      %v380 = vld [vmem:[%s326] sm:$0xff]
      %v381 = vld [vmem:[%s326 + $0x8] sm:$0xff]
      %v382 = vld [vmem:[%s336] sm:$0xff]
      %v383 = vld [vmem:[%s336 + $0x8] sm:$0xff]
      %v384 = vadd.f32 %v382, %v378
      %v385 = vadd.f32 %v383, %v379
      %v386 = vrcp.pop %v384
      %v387 = vmul.f32 %v380, %v386
      %v388 = vrcp.pop %v385
      %v389 = vmul.f32 %v381, %v388
      %v390 = vadd.f32 %v387, 1.0
      %v391 = vadd.f32 %v389, 1.0
      %v392 = vlog2.pop %v390
      %v393 = vmul.f32 %v392, 0.6931472
      %v394 = vlog2.pop %v391
      %v395 = vmul.f32 %v394, 0.6931472
      %v396 = vmul.f32 %v393, 1.442695
      %v397 = vmul.f32 %v395, 1.442695
      %vm398 = vcmask 7168
      %v399 = vsel %vm398, %v396, 0.0
      %v400 = vsel %vm398, %v397, 0.0
      %v401 = vadd.f32 %v399, %v400
      %402 = vadd.xlane.f32.xlu0 %v401
      %v403 = vpop.xlane.xlu0 %402
      %v404 = vrot.slane %v403, 4
      %v405 = vadd.f32 %v403, %v404
      %v406 = vrot.slane %v405, 2
      %v407 = vadd.f32 %v405, %v406
      %v408 = vrot.slane %v407, 1
      %v409 = vadd.f32 %v407, %v408
      %s410 = vtos %v409
      %v411 = vstv %s410
      %vm412 = vcmask 0
      %413 = vst.msk [vmem:[%s353] sm:$0x1] %vm412, %v411
      %v414 = vand.u32 2147483647, %v396
      %v415 = vand.u32 2147483647, %v397
      %v416 = vsel %vm398, %v414, 0.0
      %v417 = vsel %vm398, %v415, 0.0
      %v418 = vadd.f32 %v416, %v417
      %419 = vadd.xlane.f32.xlu0 %v418
      %v420 = vpop.xlane.xlu0 %419
      %v421 = vrot.slane %v420, 4
      %v422 = vadd.f32 %v420, %v421
      %v423 = vrot.slane %v422, 2
      %v424 = vadd.f32 %v422, %v423
      %v425 = vrot.slane %v424, 1
      %v426 = vadd.f32 %v424, %v425
      %s427 = vtos %v426
      %v428 = vstv %s427
      %429 = vst.msk [vmem:[%s359] sm:$0x1] %vm412, %v428
      %p430 = scmp.lt.s32.totalorder %s21, 1
      %s431 = scalar_select %p430, %s21, 1
      %p432 = scmp.lt.s32.totalorder %s22, 0
      %s433 = scalar_select %p432, %s22, 0
      %s434 = sadd.s32 %s433, %s431
      %s435 = scalar_lea.vmem %s4, %s434
      %p436 = scmp.lt.s32.totalorder %s21, 1
      %s437 = scalar_select %p436, %s21, 1
      %p438 = scmp.lt.s32.totalorder %s22, 0
      %s439 = scalar_select %p438, %s22, 0
      %s440 = sadd.s32 %s439, %s437
      %s441 = scalar_lea.vmem %s5, %s440
      // Predicated region
      $region37: #{tpu_custom_call.1} parent=35 // pred_check
        %p442 = pneg %p159
      $region38: #{tpu_custom_call.1} parent=35 // pred_check_branch
        %444 = sbr.rel (%p442) target = $region40
      $region39: #{tpu_custom_call.1} parent=35 // pred_region
        _
      $region40: #{tpu_custom_call.1} parent=35 // pred_fallthru
        _
      // Predicated region
      $region41: #{tpu_custom_call.1} parent=35 // pred_check
        %p445 = pneg %p187
      $region42: #{tpu_custom_call.1} parent=35 // pred_check_branch
        %447 = sbr.rel (%p445) target = $region44
      $region43: #{tpu_custom_call.1} parent=35 // pred_region
        _
      $region44: #{tpu_custom_call.1} parent=35 // pred_fallthru
        _
    $region36: #{tpu_custom_call.1} parent=5 // pred_fallthru
      _
    %p448 = scmp.le.s32.totalorder 2, %s12
    // Predicated region
    $region45: #{tpu_custom_call.1} parent=5 // pred_check
      %p449 = pneg %p448
    $region46: #{tpu_custom_call.1} parent=5 // pred_check_branch
      %451 = sbr.rel (%p449) target = $region48
    $region47: #{tpu_custom_call.1} parent=5 // pred_region
      %s452 = ssub.s32 %s12, 2
      // Predicated region
      $region49: #{tpu_custom_call.1} parent=47 // pred_check
        %p453 = pneg %p165
      $region50: #{tpu_custom_call.1} parent=47 // pred_check_branch
        %455 = sbr.rel (%p453) target = $region52
      $region51: #{tpu_custom_call.1} parent=47 // pred_region
        %p456 = scmp.lt.s32.totalorder %s23, 1
        %s457 = scalar_select %p456, %s23, 1
        %p458 = scmp.lt.s32.totalorder %s24, 0
        %s459 = scalar_select %p458, %s24, 0
        %s460 = sadd.s32 %s459, %s457
        %s461 = scalar_lea.vmem %s4, %s460
      $region52: #{tpu_custom_call.1} parent=47 // pred_fallthru
        _
      // Predicated region
      $region53: #{tpu_custom_call.1} parent=47 // pred_check
        %p462 = pneg %p193
      $region54: #{tpu_custom_call.1} parent=47 // pred_check_branch
        %464 = sbr.rel (%p462) target = $region56
      $region55: #{tpu_custom_call.1} parent=47 // pred_region
        %p465 = scmp.lt.s32.totalorder %s23, 1
        %s466 = scalar_select %p465, %s23, 1
        %p467 = scmp.lt.s32.totalorder %s24, 0
        %s468 = scalar_select %p467, %s24, 0
        %s469 = sadd.s32 %s468, %s466
        %s470 = scalar_lea.vmem %s5, %s469
      $region56: #{tpu_custom_call.1} parent=47 // pred_fallthru
        _
    $region48: #{tpu_custom_call.1} parent=5 // pred_fallthru
      _
  $region6: #{tpu_custom_call.1} parent=0 // loop_footer
    %s16 = sadd.s32 1, %s12
  $region7: #{tpu_custom_call.1} parent=0 // loop_footer_branch
    %11 = sbr.rel target = $region3
  $region8: #{tpu_custom_call.1} parent=0 // loop_exit
    _

</llo_original>
